<compile_context>
chip_gen: v7x
topology: tpu7x:2x2x1
jax: 0.10.0
libtpu: 0.0.40
codegen_flags: <defaults>
</compile_context>

<pallas_src>
import functools
import math

import jax
import jax.numpy as jnp
from jax import lax
from jax.experimental import pallas as pl
from jax.experimental.pallas import tpu as pltpu

EPS = 1e-5


def _round_up(x, m):
    return -(-x // m) * m


def dense_layer_kernel(x_ref, scale_ref, shift_ref, w_ref, b_ref,
                       mprev_ref, mnext_ref, o_ref, hbuf_ref, *, tile_p):
    # x_ref:          (Cin_p, TILE_P)   lane-dense activations for this tile
    # scale/shift:    (Cin_p, 1)        folded BN affine (precomputed batch stats)
    # w_ref:          (3, Cout_p, Cin_p) conv taps [l-1, l, l+1]
    # b_ref:          (Cout_p, 1)
    # mprev/mnext:    (1, TILE_P)       0/1 sample-boundary masks
    # o_ref:          (Cout_p, TILE_P)
    # hbuf_ref:       (Cin_p, TILE_P + 256) VMEM scratch for lane-shifted taps
    x = x_ref[...]

    # --- BatchNorm (folded scale/shift) + ReLU: one FMA + max.
    h = jnp.maximum(x * scale_ref[...] + shift_ref[...], 0.0)

    # --- Lane-shifted taps: stage h at a 128-lane offset in scratch, zero the
    # two border lanes, read the +/-1 windows, apply the periodic boundary masks
    # (0 at sample position 0 for the "prev" tap, 0 at position L-1 for "next").
    # Tile boundaries coincide with sample boundaries (TILE_P % L == 0), so no
    # halo is needed and no tap ever mixes lanes from different samples.
    zero_col = jnp.zeros((x.shape[0], 1), dtype=jnp.float32)
    hbuf_ref[:, 127:128] = zero_col
    hbuf_ref[:, 128 + tile_p:129 + tile_p] = zero_col
    hbuf_ref[:, 128:128 + tile_p] = h
    h_prev = hbuf_ref[:, 127:127 + tile_p] * mprev_ref[...]
    h_next = hbuf_ref[:, 129:129 + tile_p] * mnext_ref[...]

    # --- k=3 conv as three accumulating MXU matmuls (no activation concat).
    acc = jnp.dot(w_ref[1], h, preferred_element_type=jnp.float32)
    acc = acc + jnp.dot(w_ref[0], h_prev, preferred_element_type=jnp.float32)
    acc = acc + jnp.dot(w_ref[2], h_next, preferred_element_type=jnp.float32)
    o_ref[...] = (acc + b_ref[...]).astype(o_ref.dtype)


def dense_layer(x, gamma, beta, weight, bias):
    """x: (N, Cin, L); gamma/beta: (Cin,); weight: (Cout, Cin, 3); bias: (Cout,)."""
    n, cin, seq_len = x.shape
    cout, _, k = weight.shape
    assert k == 3
    nl = n * seq_len
    cin_p = _round_up(cin, 8)
    cout_p = _round_up(cout, 8)

    # --- BN batch statistics hoisted out of the kernel (two-pass biased var,
    # matching torch's training-mode forward), folded into scale/shift.
    mean = jnp.mean(x, axis=(0, 2))
    var = jnp.mean(jnp.square(x - mean[None, :, None]), axis=(0, 2))
    scale = gamma * lax.rsqrt(var + EPS)
    shift = beta - scale * mean
    scale_p = jnp.pad(scale, (0, cin_p - cin)).reshape(cin_p, 1)
    shift_p = jnp.pad(shift, (0, cin_p - cin)).reshape(cin_p, 1)

    # --- Lane tiling: TILE_P must be a multiple of lcm(L, 128) so sample
    # boundaries align with tile boundaries; pick the largest tile up to ~8K
    # lanes (fits v7x's 64 MiB VMEM with large margin, still few grid steps).
    base = (seq_len * 128) // math.gcd(seq_len, 128)
    target = 8192
    tile_p = max(base, (target // base) * base) if base <= target else base
    tile_p = min(tile_p, _round_up(nl, base))
    p = _round_up(nl, tile_p)
    grid = (p // tile_p,)

    # --- Lane-dense activation slab (layout plumbing done by XLA).
    x2 = jnp.transpose(x, (1, 0, 2)).reshape(cin, nl)
    x2 = jnp.pad(x2, ((0, cin_p - cin), (0, p - nl)))

    # --- Conv weight as (3, Cout_p, Cin_p) taps, bias as (Cout_p, 1).
    w_koi = jnp.transpose(weight, (2, 0, 1))
    w_p = jnp.pad(w_koi, ((0, 0), (0, cout_p - cout), (0, cin_p - cin)))
    bias_p = jnp.pad(bias, (0, cout_p - cout)).reshape(cout_p, 1)

    # --- Boundary masks: periodic with period L, and TILE_P % L == 0, so one
    # (1, TILE_P) mask serves every tile (loaded once, VMEM-resident).
    pos = jnp.arange(tile_p, dtype=jnp.int32) % seq_len
    mask_prev = (pos != 0).astype(x.dtype).reshape(1, tile_p)
    mask_next = (pos != seq_len - 1).astype(x.dtype).reshape(1, tile_p)

    kernel = functools.partial(dense_layer_kernel, tile_p=tile_p)

    vmem_bytes = 4 * (
        2 * cin_p * tile_p              # x block (double-buffered)
        + 2 * cout_p * tile_p           # out block (double-buffered)
        + cin_p * (tile_p + 256)        # tap scratch
        + 4 * (cin_p + cout_p)          # scale/shift/bias
        + 3 * cout_p * cin_p            # weights
        + 4 * tile_p                    # masks
        + 4 * (cin_p + cout_p) * tile_p # headroom for h/h_prev/h_next/acc temps
    )
    vmem_limit = int(min(max(2 * vmem_bytes, 32 * 1024 * 1024), 64 * 1024 * 1024))

    out2 = pl.pallas_call(
        kernel,
        out_shape=jax.ShapeDtypeStruct((cout_p, p), x.dtype),
        grid=grid,
        in_specs=[
            pl.BlockSpec((cin_p, tile_p), lambda i: (0, i)),        # x (streamed)
            pl.BlockSpec((cin_p, 1), lambda i: (0, 0)),             # scale (resident)
            pl.BlockSpec((cin_p, 1), lambda i: (0, 0)),             # shift
            pl.BlockSpec((3, cout_p, cin_p), lambda i: (0, 0, 0)),  # conv taps
            pl.BlockSpec((cout_p, 1), lambda i: (0, 0)),            # bias
            pl.BlockSpec((1, tile_p), lambda i: (0, 0)),            # prev mask
            pl.BlockSpec((1, tile_p), lambda i: (0, 0)),            # next mask
        ],
        out_specs=pl.BlockSpec((cout_p, tile_p), lambda i: (0, i)),
        scratch_shapes=[pltpu.VMEM((cin_p, tile_p + 256), jnp.float32)],
        compiler_params=pltpu.CompilerParams(
            dimension_semantics=("parallel",),
            vmem_limit_bytes=vmem_limit,
        ),
        cost_estimate=pl.CostEstimate(
            flops=2 * 3 * cin * cout * nl,
            transcendentals=0,
            bytes_accessed=4 * (cin_p + cout_p) * p,
        ),
    )(x2, scale_p, shift_p, w_p, bias_p, mask_prev, mask_next)

    # (Cout_p, P) -> (N, Cout, L)
    out2 = out2[:cout, :nl].reshape(cout, n, seq_len)
    return jnp.transpose(out2, (1, 0, 2))


def reference(x, gamma, beta, weight, bias):
    """Pure-JAX reference with the module's forward semantics (training-mode BN)."""
    mean = jnp.mean(x, axis=(0, 2), keepdims=True)
    var = jnp.mean(jnp.square(x - mean), axis=(0, 2), keepdims=True)
    h = gamma[None, :, None] * (x - mean) / jnp.sqrt(var + EPS) + beta[None, :, None]
    h = jnp.maximum(h, 0.0)
    out = lax.conv_general_dilated(
        h, weight, window_strides=(1,), padding=((1, 1),),
        dimension_numbers=("NCH", "OIH", "NCH"))
    return out + bias[None, :, None]


if __name__ == "__main__":
    # Small shapes consistent with the module: batch=2, in_channels=4, length=16,
    # growth_rate=8.
    N, Cin, L, Cout, K = 2, 4, 16, 8, 3

    key = jax.random.PRNGKey(0)
    kx, kg, kb, kw, kbias = jax.random.split(key, 5)

    x = jax.random.normal(kx, (N, Cin, L), dtype=jnp.float32)
    gamma = 1.0 + 0.1 * jax.random.normal(kg, (Cin,), dtype=jnp.float32)      # BN weight
    beta = 0.1 * jax.random.normal(kb, (Cin,), dtype=jnp.float32)             # BN bias
    weight = 0.2 * jax.random.normal(kw, (Cout, Cin, K), dtype=jnp.float32)   # conv weight
    bias = 0.1 * jax.random.normal(kbias, (Cout,), dtype=jnp.float32)         # conv bias

    out = dense_layer(x, gamma, beta, weight, bias)
    out = jax.block_until_ready(out)

    ref = reference(x, gamma, beta, weight, bias)
    assert out.shape == (N, Cout, L)
    assert jnp.allclose(out, ref, atol=1e-4, rtol=1e-4), "mismatch vs reference"

    print("KERNEL_OK")
</pallas_src>

<mosaic_0001>
module attributes {stable_mosaic.version = 11 : i64} {
  func.func @dense_layer_kernel(%arg0: i32, %arg1: memref<8x128xf32, #tpu.memory_space<vmem>>, %arg2: memref<8x1xf32, #tpu.memory_space<vmem>>, %arg3: memref<8x1xf32, #tpu.memory_space<vmem>>, %arg4: memref<3x8x8xf32, #tpu.memory_space<vmem>>, %arg5: memref<8x1xf32, #tpu.memory_space<vmem>>, %arg6: memref<1x128xf32, #tpu.memory_space<vmem>>, %arg7: memref<1x128xf32, #tpu.memory_space<vmem>>, %arg8: memref<8x128xf32, #tpu.memory_space<vmem>>, %arg9: memref<8x384xf32, #tpu.memory_space<vmem>>) attributes {dimension_semantics = [#tpu.dimension_semantics<parallel>], iteration_bounds = array<i64: 1>, scalar_prefetch = 0 : i64, scratch_operands = 1 : i64, tpu.core_type = #tpu.core_type<tc>, window_params = [{transform_indices = @transform_0, window_bounds = array<i64: 8, 128>}, {pipeline_mode = #tpu.pipeline_mode<synchronous>, transform_indices = @transform_1, window_bounds = array<i64: 8, 1>}, {pipeline_mode = #tpu.pipeline_mode<synchronous>, transform_indices = @transform_2, window_bounds = array<i64: 8, 1>}, {pipeline_mode = #tpu.pipeline_mode<synchronous>, transform_indices = @transform_3, window_bounds = array<i64: 3, 8, 8>}, {pipeline_mode = #tpu.pipeline_mode<synchronous>, transform_indices = @transform_4, window_bounds = array<i64: 8, 1>}, {pipeline_mode = #tpu.pipeline_mode<synchronous>, transform_indices = @transform_5, window_bounds = array<i64: 1, 128>}, {pipeline_mode = #tpu.pipeline_mode<synchronous>, transform_indices = @transform_6, window_bounds = array<i64: 1, 128>}, {transform_indices = @transform_7, window_bounds = array<i64: 8, 128>}]} {
    %c0 = arith.constant 0 : index
    %c0_0 = arith.constant 0 : index
    %0 = vector.load %arg1[%c0, %c0_0] : memref<8x128xf32, #tpu.memory_space<vmem>>, vector<8x128xf32>
    %c0_1 = arith.constant 0 : index
    %c0_2 = arith.constant 0 : index
    %1 = vector.load %arg2[%c0_1, %c0_2] : memref<8x1xf32, #tpu.memory_space<vmem>>, vector<8x1xf32>
    %2 = vector.broadcast %1 : vector<8x1xf32> to vector<8x128xf32>
    %3 = arith.mulf %0, %2 : vector<8x128xf32>
    %c0_3 = arith.constant 0 : index
    %c0_4 = arith.constant 0 : index
    %4 = vector.load %arg3[%c0_3, %c0_4] : memref<8x1xf32, #tpu.memory_space<vmem>>, vector<8x1xf32>
    %5 = vector.broadcast %4 : vector<8x1xf32> to vector<8x128xf32>
    %6 = arith.addf %3, %5 : vector<8x128xf32>
    %cst = arith.constant 0.000000e+00 : f32
    %7 = vector.broadcast %cst : f32 to vector<8x128xf32>
    %8 = arith.maximumf %6, %7 : vector<8x128xf32>
    %cst_5 = arith.constant 0.000000e+00 : f32
    %9 = vector.broadcast %cst_5 : f32 to vector<8x1xf32>
    %c0_6 = arith.constant 0 : index
    %c127 = arith.constant 127 : index
    %10 = vector.load %arg9[%c0_6, %c127] : memref<8x384xf32, #tpu.memory_space<vmem>>, vector<8x1xf32>
    tpu.vector_store %arg9[%c0_6, %c127], %9 {strides = array<i32>} : memref<8x384xf32, #tpu.memory_space<vmem>>, vector<8x1xf32>,
    %c0_7 = arith.constant 0 : index
    %c256 = arith.constant 256 : index
    %11 = vector.load %arg9[%c0_7, %c256] : memref<8x384xf32, #tpu.memory_space<vmem>>, vector<8x1xf32>
    tpu.vector_store %arg9[%c0_7, %c256], %9 {strides = array<i32>} : memref<8x384xf32, #tpu.memory_space<vmem>>, vector<8x1xf32>,
    %c0_8 = arith.constant 0 : index
    %c128 = arith.constant 128 : index
    %12 = vector.load %arg9[%c0_8, %c128] : memref<8x384xf32, #tpu.memory_space<vmem>>, vector<8x128xf32>
    tpu.vector_store %arg9[%c0_8, %c128], %8 {strides = array<i32>} : memref<8x384xf32, #tpu.memory_space<vmem>>, vector<8x128xf32>,
    %c0_9 = arith.constant 0 : index
    %c127_10 = arith.constant 127 : index
    %13 = vector.load %arg9[%c0_9, %c127_10] : memref<8x384xf32, #tpu.memory_space<vmem>>, vector<8x128xf32>
    %c0_11 = arith.constant 0 : index
    %c0_12 = arith.constant 0 : index
    %14 = vector.load %arg6[%c0_11, %c0_12] : memref<1x128xf32, #tpu.memory_space<vmem>>, vector<1x128xf32>
    %15 = vector.broadcast %14 : vector<1x128xf32> to vector<8x128xf32>
    %16 = arith.mulf %13, %15 : vector<8x128xf32>
    %c0_13 = arith.constant 0 : index
    %c129 = arith.constant 129 : index
    %17 = vector.load %arg9[%c0_13, %c129] : memref<8x384xf32, #tpu.memory_space<vmem>>, vector<8x128xf32>
    %c0_14 = arith.constant 0 : index
    %c0_15 = arith.constant 0 : index
    %18 = vector.load %arg7[%c0_14, %c0_15] : memref<1x128xf32, #tpu.memory_space<vmem>>, vector<1x128xf32>
    %19 = vector.broadcast %18 : vector<1x128xf32> to vector<8x128xf32>
    %20 = arith.mulf %17, %19 : vector<8x128xf32>
    %c1 = arith.constant 1 : index
    %c0_16 = arith.constant 0 : index
    %c0_17 = arith.constant 0 : index
    %21 = vector.load %arg4[%c1, %c0_16, %c0_17] : memref<3x8x8xf32, #tpu.memory_space<vmem>>, vector<1x8x8xf32>
    %22 = vector.shape_cast %21 : vector<1x8x8xf32> to vector<8x8xf32>
    %cst_18 = arith.constant dense<0.000000e+00> : vector<8x128xf32>
    %23 = tpu.matmul %22, %8, %cst_18 {dimension_numbers = #tpu.dot_dimension_numbers<[1], [0], [0], [1], [0, 0, 1, 1], [], []>} : vector<8x8xf32>, vector<8x128xf32>, vector<8x128xf32> -> vector<8x128xf32>
    %c0_19 = arith.constant 0 : index
    %c0_20 = arith.constant 0 : index
    %c0_21 = arith.constant 0 : index
    %24 = vector.load %arg4[%c0_19, %c0_20, %c0_21] : memref<3x8x8xf32, #tpu.memory_space<vmem>>, vector<1x8x8xf32>
    %25 = vector.shape_cast %24 : vector<1x8x8xf32> to vector<8x8xf32>
    %cst_22 = arith.constant dense<0.000000e+00> : vector<8x128xf32>
    %26 = tpu.matmul %25, %16, %cst_22 {dimension_numbers = #tpu.dot_dimension_numbers<[1], [0], [0], [1], [0, 0, 1, 1], [], []>} : vector<8x8xf32>, vector<8x128xf32>, vector<8x128xf32> -> vector<8x128xf32>
    %27 = arith.addf %23, %26 : vector<8x128xf32>
    %c2 = arith.constant 2 : index
    %c0_23 = arith.constant 0 : index
    %c0_24 = arith.constant 0 : index
    %28 = vector.load %arg4[%c2, %c0_23, %c0_24] : memref<3x8x8xf32, #tpu.memory_space<vmem>>, vector<1x8x8xf32>
    %29 = vector.shape_cast %28 : vector<1x8x8xf32> to vector<8x8xf32>
    %cst_25 = arith.constant dense<0.000000e+00> : vector<8x128xf32>
    %30 = tpu.matmul %29, %20, %cst_25 {dimension_numbers = #tpu.dot_dimension_numbers<[1], [0], [0], [1], [0, 0, 1, 1], [], []>} : vector<8x8xf32>, vector<8x128xf32>, vector<8x128xf32> -> vector<8x128xf32>
    %31 = arith.addf %27, %30 : vector<8x128xf32>
    %c0_26 = arith.constant 0 : index
    %c0_27 = arith.constant 0 : index
    %32 = vector.load %arg5[%c0_26, %c0_27] : memref<8x1xf32, #tpu.memory_space<vmem>>, vector<8x1xf32>
    %33 = vector.broadcast %32 : vector<8x1xf32> to vector<8x128xf32>
    %34 = arith.addf %31, %33 : vector<8x128xf32>
    %c0_28 = arith.constant 0 : index
    %c0_29 = arith.constant 0 : index
    %35 = vector.load %arg8[%c0_28, %c0_29] : memref<8x128xf32, #tpu.memory_space<vmem>>, vector<8x128xf32>
    tpu.vector_store %arg8[%c0_28, %c0_29], %34 {strides = array<i32>} : memref<8x128xf32, #tpu.memory_space<vmem>>, vector<8x128xf32>,
    return
  }
  func.func @transform_0(%arg0: i32) -> (i32, i32) {
    %c0_i32 = arith.constant 0 : i32
    %c0_i32_0 = arith.constant 0 : i32
    return %c0_i32, %arg0 : i32, i32
  }
  func.func @transform_1(%arg0: i32) -> (i32, i32) {
    %c0_i32 = arith.constant 0 : i32
    %c0_i32_0 = arith.constant 0 : i32
    %c0_i32_1 = arith.constant 0 : i32
    return %c0_i32, %c0_i32_0 : i32, i32
  }
  func.func @transform_2(%arg0: i32) -> (i32, i32) {
    %c0_i32 = arith.constant 0 : i32
    %c0_i32_0 = arith.constant 0 : i32
    %c0_i32_1 = arith.constant 0 : i32
    return %c0_i32, %c0_i32_0 : i32, i32
  }
  func.func @transform_3(%arg0: i32) -> (i32, i32, i32) {
    %c0_i32 = arith.constant 0 : i32
    %c0_i32_0 = arith.constant 0 : i32
    %c0_i32_1 = arith.constant 0 : i32
    %c0_i32_2 = arith.constant 0 : i32
    return %c0_i32, %c0_i32_0, %c0_i32_1 : i32, i32, i32
  }
  func.func @transform_4(%arg0: i32) -> (i32, i32) {
    %c0_i32 = arith.constant 0 : i32
    %c0_i32_0 = arith.constant 0 : i32
    %c0_i32_1 = arith.constant 0 : i32
    return %c0_i32, %c0_i32_0 : i32, i32
  }
  func.func @transform_5(%arg0: i32) -> (i32, i32) {
    %c0_i32 = arith.constant 0 : i32
    %c0_i32_0 = arith.constant 0 : i32
    %c0_i32_1 = arith.constant 0 : i32
    return %c0_i32, %c0_i32_0 : i32, i32
  }
  func.func @transform_6(%arg0: i32) -> (i32, i32) {
    %c0_i32 = arith.constant 0 : i32
    %c0_i32_0 = arith.constant 0 : i32
    %c0_i32_1 = arith.constant 0 : i32
    return %c0_i32, %c0_i32_0 : i32, i32
  }
  func.func @transform_7(%arg0: i32) -> (i32, i32) {
    %c0_i32 = arith.constant 0 : i32
    %c0_i32_0 = arith.constant 0 : i32
    return %c0_i32, %arg0 : i32, i32
  }
}

</mosaic_0001>

<llo_original>
// kernel: tpu_custom_call.1
$region0: #{tpu_custom_call.1}
  #allocation0 [shape = 'u32[]', space=smem, size = 0x4, offset = 0x4, fixed_abs, tag = 'smem constant byte address 0x4 - core index']
  #allocation1 [shape = 'u32[144,128]{1,0:T(1,128)}', space=vmem, size = 0x12000, scoped, tag = 'internal scratch']
  #allocation2 [shape = 'f32[8,384]{1,0:T(8,128)}', space=vmem, size = 0x3000, scoped, tag = 'scratch operand']
  %s0 = inlined_call_operand.vmem [shape: f32[8,128], index: 0, kind: input, shape index: {}]
  %s1 = inlined_call_operand.vmem [shape: f32[8,1], index: 1, kind: input, shape index: {}]
  %s2 = inlined_call_operand.vmem [shape: f32[8,1], index: 2, kind: input, shape index: {}]
  %s3 = inlined_call_operand.vmem [shape: f32[3,8,8], index: 3, kind: input, shape index: {}]
  %s4 = inlined_call_operand.vmem [shape: f32[8,1], index: 4, kind: input, shape index: {}]
  %s5 = inlined_call_operand.vmem [shape: f32[1,128], index: 5, kind: input, shape index: {}]
  %s6 = inlined_call_operand.vmem [shape: f32[1,128], index: 6, kind: input, shape index: {}]
  %s7 = inlined_call_operand.hbm [shape: f32[8,128], index: 7, kind: output, shape index: {}]
  %s8 = sld [smem:[#allocation0]]
  $region38: #{tpu_custom_call.1} parent=0
    _
  %s10 = ssub.s32 1, %s8
  %s11 = scalar_select 0, %s10, %s8
  $region1: #{tpu_custom_call.1} parent=0
    #allocation3 [shape = 'u8[4096]{0}', space=vmem, size = 0x1000, scoped, tag = 'output window, operand 0, single buffered']
    #allocation4 [shape = 's32[1]{0}', space=sflag, size = 0x4, scoped, tag = 'scoped memory for tpu_custom_call.1']
    %12 = vsyncpa [#allocation4], 0
    // Predicated region
    $region2: #{tpu_custom_call.1} parent=1 // pred_check
      _
    $region3: #{tpu_custom_call.1} parent=1 // pred_check_branch
      %14 = sbr.rel (0) target = $region5
    $region4: #{tpu_custom_call.1} parent=1 // pred_region
      _
    $region5: #{tpu_custom_call.1} parent=1 // pred_fallthru
      _
    // Predicated region
    $region6: #{tpu_custom_call.1} parent=1 // pred_check
      _
    $region7: #{tpu_custom_call.1} parent=1 // pred_check_branch
      %16 = sbr.rel (0) target = $region9
    $region8: #{tpu_custom_call.1} parent=1 // pred_region
      _
    $region9: #{tpu_custom_call.1} parent=1 // pred_fallthru
      _
    // Predicated region
    $region10: #{tpu_custom_call.1} parent=1 // pred_check
      _
    $region11: #{tpu_custom_call.1} parent=1 // pred_check_branch
      %18 = sbr.rel (0) target = $region13
    $region12: #{tpu_custom_call.1} parent=1 // pred_region
      _
    $region13: #{tpu_custom_call.1} parent=1 // pred_fallthru
      _
    // Predicated region
    $region14: #{tpu_custom_call.1} parent=1 // pred_check
      _
    $region15: #{tpu_custom_call.1} parent=1 // pred_check_branch
      %20 = sbr.rel (0) target = $region17
    $region16: #{tpu_custom_call.1} parent=1 // pred_region
      _
    $region17: #{tpu_custom_call.1} parent=1 // pred_fallthru
      _
    // Predicated region
    $region18: #{tpu_custom_call.1} parent=1 // pred_check
      _
    $region19: #{tpu_custom_call.1} parent=1 // pred_check_branch
      %22 = sbr.rel (0) target = $region21
    $region20: #{tpu_custom_call.1} parent=1 // pred_region
      _
    $region21: #{tpu_custom_call.1} parent=1 // pred_fallthru
      _
    // Predicated region
    $region22: #{tpu_custom_call.1} parent=1 // pred_check
      _
    $region23: #{tpu_custom_call.1} parent=1 // pred_check_branch
      %24 = sbr.rel (0) target = $region25
    $region24: #{tpu_custom_call.1} parent=1 // pred_region
      _
    $region25: #{tpu_custom_call.1} parent=1 // pred_fallthru
      _
    // Predicated region
    $region26: #{tpu_custom_call.1} parent=1 // pred_check
      _
    $region27: #{tpu_custom_call.1} parent=1 // pred_check_branch
      %26 = sbr.rel (0) target = $region29
    $region28: #{tpu_custom_call.1} parent=1 // pred_region
      _
    $region29: #{tpu_custom_call.1} parent=1 // pred_fallthru
      _
    %v27 = vld [vmem:[%s0] sm:$0xff]
    %v28 = vld [vmem:[%s1] sm:$0xff]
    %30 = vset.pattern.permute.xlu0 0
    %31 = vperm.xlu0 %30, %v28
    %v32 = vpop.permute.xlu0 %31
    %v34 = vmul.f32 %v27, %v32
    %v35 = vld [vmem:[%s2] sm:$0xff]
    %37 = vset.pattern.permute.xlu0 0
    %38 = vperm.xlu0 %37, %v35
    %v39 = vpop.permute.xlu0 %38
    %v41 = vadd.f32 %v34, %v39
    %v42 = vmax.f32 %v41, 0.0
    %vm43 = vcmask 1048568
    %44 = vst.msk [vmem:[#allocation2] sm:$0xff] %vm43, 0.0
    %vm45 = vcmask 7168
    %46 = vst.msk [vmem:[#allocation2 + $0x10] sm:$0xff] %vm45, 0.0
    %47 = vst [vmem:[#allocation2 + $0x8] sm:$0xff] %v42
    %v48 = vld [vmem:[#allocation2] sm:$0xff]
    %v49 = vld [vmem:[#allocation2 + $0x8] sm:$0xff]
    %v50 = vld [vmem:[%s5] sm:$0x1]
    %v52 = vlaneseq
    %v53 = vshrl.u32 %v52, 7
    %v54 = vsub.s32 0, %v53
    %v55 = vrot.slane %v50, %v54
    %56 = vrot.lane.b32.xlu0 %v55, 127
    %v57 = vpop.permute.xlu0 %56
    %v59 = vmul.f32 %v48, %v57
    %v60 = vmul.f32 %v49, %v57
    %v61 = vld [vmem:[#allocation2 + $0x8] sm:$0xff]
    %v62 = vld [vmem:[#allocation2 + $0x10] sm:$0xff]
    %v63 = vld [vmem:[%s6] sm:$0x1]
    %v65 = vlaneseq
    %v66 = vshrl.u32 %v65, 7
    %v67 = vsub.s32 0, %v66
    %v68 = vrot.slane %v63, %v67
    %69 = vrot.lane.b32.xlu0 %v68, 1
    %v70 = vpop.permute.xlu0 %69
    %v72 = vmul.f32 %v61, %v70
    %v73 = vmul.f32 %v62, %v70
    %s74 = scalar_lea.vmem %s3, 8
    %v75 = vld [vmem:[%s74] sm:$0xff]
    %v76 = vld [vmem:[%s3] sm:$0xff]
    %79 = vrot.lane.b32.xlu0 %v59, 1
    %v80 = vpop.permute.xlu0 %79
    %81 = vrot.lane.b32.xlu0 %v60, 1
    %v82 = vpop.permute.xlu0 %81
    %v83 = vsel %vm45, %v80, %v82
    %vm85 = vcmask 64512
    %v87 = vsel %vm85, %v76, 0
    %89 = vmatprep.subr.mxu0 0.0
    %90 = vmatpush1.msra.mxu0 %v83
    %91 = vmatprep.subr.mxu0 0.0
    %92 = vmatpush1.msra.mxu0 0.0
    %93 = vmatprep.subr.mxu0 0.0
    %94 = vmatpush1.msra.mxu0 0.0
    %95 = vmatprep.subr.mxu0 0.0
    %96 = vmatpush1.msra.mxu0 0.0
    %97 = vmatprep.subr.mxu0 0.0
    %98 = vmatpush1.msra.mxu0 0.0
    %99 = vmatprep.subr.mxu0 0.0
    %100 = vmatpush1.msra.mxu0 0.0
    %101 = vmatprep.subr.mxu0 0.0
    %102 = vmatpush1.msra.mxu0 0.0
    %103 = vmatprep.subr.mxu0 0.0
    %104 = vmatpush1.msra.mxu0 0.0
    %105 = vmatprep.subr.mxu0 0.0
    %106 = vmatpush1.msra.mxu0 0.0
    %107 = vmatprep.subr.mxu0 0.0
    %108 = vmatpush1.msra.mxu0 0.0
    %109 = vmatprep.subr.mxu0 0.0
    %110 = vmatpush1.msra.mxu0 0.0
    %111 = vmatprep.subr.mxu0 0.0
    %112 = vmatpush1.msra.mxu0 0.0
    %113 = vmatprep.subr.mxu0 0.0
    %114 = vmatpush1.msra.mxu0 0.0
    %115 = vmatprep.subr.mxu0 0.0
    %116 = vmatpush1.msra.mxu0 0.0
    %117 = vmatprep.subr.mxu0 0.0
    %118 = vmatpush1.msra.mxu0 0.0
    %119 = vmatprep.subr.mxu0 0.0
    %120 = vmatpush1.msra.mxu0 0.0
    %121 = vmatprep.subr.mxu0 0.0
    %122 = vmatpush1.msra.mxu0 0.0
    %123 = vmatprep.subr.mxu0 0.0
    %124 = vmatpush1.msra.mxu0 0.0
    %125 = vmatprep.subr.mxu0 0.0
    %126 = vmatpush1.msra.mxu0 0.0
    %127 = vmatprep.subr.mxu0 0.0
    %128 = vmatpush1.msra.mxu0 0.0
    %129 = vmatprep.subr.mxu0 0.0
    %130 = vmatpush1.msra.mxu0 0.0
    %131 = vmatprep.subr.mxu0 0.0
    %132 = vmatpush1.msra.mxu0 0.0
    %133 = vmatprep.subr.mxu0 0.0
    %134 = vmatpush1.msra.mxu0 0.0
    %135 = vmatprep.subr.mxu0 0.0
    %136 = vmatpush1.msra.mxu0 0.0
    %137 = vmatprep.subr.mxu0 0.0
    %138 = vmatpush1.msra.mxu0 0.0
    %139 = vmatprep.subr.mxu0 0.0
    %140 = vmatpush1.msra.mxu0 0.0
    %141 = vmatprep.subr.mxu0 0.0
    %142 = vmatpush1.msra.mxu0 0.0
    %143 = vmatprep.subr.mxu0 0.0
    %144 = vmatpush1.msra.mxu0 0.0
    %145 = vmatprep.subr.mxu0 0.0
    %146 = vmatpush1.msra.mxu0 0.0
    %147 = vmatprep.subr.mxu0 0.0
    %148 = vmatpush1.msra.mxu0 0.0
    %149 = vmatprep.subr.mxu0 0.0
    %150 = vmatpush1.msra.mxu0 0.0
    %151 = vmatprep.subr.mxu0 0.0
    %152 = vmatpush1.msra.mxu0 0.0
    %153 = vmatprep.mubr.f32.mxu0 0.0
    %154 = vmatmul.mubr.f32.gmra.mrb[0].mxu0 %v87
    %v155 = vpop.f32.mrb[0].mxu0
    %v156 = vadd.f32 0.0, %v155
    %v157 = vpop.f32.mrb[0].mxu0
    %158 = vdwg.mxu0
    %v160 = vsel %vm85, %v75, 0
    %162 = vmatprep.subr.mxu0 0.0
    %163 = vmatpush1.msra.mxu0 %v42
    %164 = vmatprep.subr.mxu0 0.0
    %165 = vmatpush1.msra.mxu0 0.0
    %166 = vmatprep.subr.mxu0 0.0
    %167 = vmatpush1.msra.mxu0 0.0
    %168 = vmatprep.subr.mxu0 0.0
    %169 = vmatpush1.msra.mxu0 0.0
    %170 = vmatprep.subr.mxu0 0.0
    %171 = vmatpush1.msra.mxu0 0.0
    %172 = vmatprep.subr.mxu0 0.0
    %173 = vmatpush1.msra.mxu0 0.0
    %174 = vmatprep.subr.mxu0 0.0
    %175 = vmatpush1.msra.mxu0 0.0
    %176 = vmatprep.subr.mxu0 0.0
    %177 = vmatpush1.msra.mxu0 0.0
    %178 = vmatprep.subr.mxu0 0.0
    %179 = vmatpush1.msra.mxu0 0.0
    %180 = vmatprep.subr.mxu0 0.0
    %181 = vmatpush1.msra.mxu0 0.0
    %182 = vmatprep.subr.mxu0 0.0
    %183 = vmatpush1.msra.mxu0 0.0
    %184 = vmatprep.subr.mxu0 0.0
    %185 = vmatpush1.msra.mxu0 0.0
    %186 = vmatprep.subr.mxu0 0.0
    %187 = vmatpush1.msra.mxu0 0.0
    %188 = vmatprep.subr.mxu0 0.0
    %189 = vmatpush1.msra.mxu0 0.0
    %190 = vmatprep.subr.mxu0 0.0
    %191 = vmatpush1.msra.mxu0 0.0
    %192 = vmatprep.subr.mxu0 0.0
    %193 = vmatpush1.msra.mxu0 0.0
    %194 = vmatprep.subr.mxu0 0.0
    %195 = vmatpush1.msra.mxu0 0.0
    %196 = vmatprep.subr.mxu0 0.0
    %197 = vmatpush1.msra.mxu0 0.0
    %198 = vmatprep.subr.mxu0 0.0
    %199 = vmatpush1.msra.mxu0 0.0
    %200 = vmatprep.subr.mxu0 0.0
    %201 = vmatpush1.msra.mxu0 0.0
    %202 = vmatprep.subr.mxu0 0.0
    %203 = vmatpush1.msra.mxu0 0.0
    %204 = vmatprep.subr.mxu0 0.0
    %205 = vmatpush1.msra.mxu0 0.0
    %206 = vmatprep.subr.mxu0 0.0
    %207 = vmatpush1.msra.mxu0 0.0
    %208 = vmatprep.subr.mxu0 0.0
    %209 = vmatpush1.msra.mxu0 0.0
    %210 = vmatprep.subr.mxu0 0.0
    %211 = vmatpush1.msra.mxu0 0.0
    %212 = vmatprep.subr.mxu0 0.0
    %213 = vmatpush1.msra.mxu0 0.0
    %214 = vmatprep.subr.mxu0 0.0
    %215 = vmatpush1.msra.mxu0 0.0
    %216 = vmatprep.subr.mxu0 0.0
    %217 = vmatpush1.msra.mxu0 0.0
    %218 = vmatprep.subr.mxu0 0.0
    %219 = vmatpush1.msra.mxu0 0.0
    %220 = vmatprep.subr.mxu0 0.0
    %221 = vmatpush1.msra.mxu0 0.0
    %222 = vmatprep.subr.mxu0 0.0
    %223 = vmatpush1.msra.mxu0 0.0
    %224 = vmatprep.subr.mxu0 0.0
    %225 = vmatpush1.msra.mxu0 0.0
    %226 = vmatprep.mubr.f32.mxu0 0.0
    %227 = vmatmul.mubr.f32.gmra.mrb[0].mxu0 %v160
    %v228 = vpop.f32.mrb[0].mxu0
    %v229 = vadd.f32 %v156, %v228
    %v230 = vpop.f32.mrb[0].mxu0
    %231 = vdwg.mxu0
    %s232 = scalar_lea.vmem %s3, 16
    %v233 = vld [vmem:[%s232] sm:$0xff]
    %236 = vrot.lane.b32.xlu0 %v72, 127
    %v237 = vpop.permute.xlu0 %236
    %238 = vrot.lane.b32.xlu0 %v73, 127
    %v239 = vpop.permute.xlu0 %238
    %vm240 = vcmask 1039360
    %v241 = vsel %vm240, %v237, %v239
    %v244 = vsel %vm85, %v233, 0
    %246 = vmatprep.subr.mxu0 0.0
    %247 = vmatpush1.msra.mxu0 %v241
    %248 = vmatprep.subr.mxu0 0.0
    %249 = vmatpush1.msra.mxu0 0.0
    %250 = vmatprep.subr.mxu0 0.0
    %251 = vmatpush1.msra.mxu0 0.0
    %252 = vmatprep.subr.mxu0 0.0
    %253 = vmatpush1.msra.mxu0 0.0
    %254 = vmatprep.subr.mxu0 0.0
    %255 = vmatpush1.msra.mxu0 0.0
    %256 = vmatprep.subr.mxu0 0.0
    %257 = vmatpush1.msra.mxu0 0.0
    %258 = vmatprep.subr.mxu0 0.0
    %259 = vmatpush1.msra.mxu0 0.0
    %260 = vmatprep.subr.mxu0 0.0
    %261 = vmatpush1.msra.mxu0 0.0
    %262 = vmatprep.subr.mxu0 0.0
    %263 = vmatpush1.msra.mxu0 0.0
    %264 = vmatprep.subr.mxu0 0.0
    %265 = vmatpush1.msra.mxu0 0.0
    %266 = vmatprep.subr.mxu0 0.0
    %267 = vmatpush1.msra.mxu0 0.0
    %268 = vmatprep.subr.mxu0 0.0
    %269 = vmatpush1.msra.mxu0 0.0
    %270 = vmatprep.subr.mxu0 0.0
    %271 = vmatpush1.msra.mxu0 0.0
    %272 = vmatprep.subr.mxu0 0.0
    %273 = vmatpush1.msra.mxu0 0.0
    %274 = vmatprep.subr.mxu0 0.0
    %275 = vmatpush1.msra.mxu0 0.0
    %276 = vmatprep.subr.mxu0 0.0
    %277 = vmatpush1.msra.mxu0 0.0
    %278 = vmatprep.subr.mxu0 0.0
    %279 = vmatpush1.msra.mxu0 0.0
    %280 = vmatprep.subr.mxu0 0.0
    %281 = vmatpush1.msra.mxu0 0.0
    %282 = vmatprep.subr.mxu0 0.0
    %283 = vmatpush1.msra.mxu0 0.0
    %284 = vmatprep.subr.mxu0 0.0
    %285 = vmatpush1.msra.mxu0 0.0
    %286 = vmatprep.subr.mxu0 0.0
    %287 = vmatpush1.msra.mxu0 0.0
    %288 = vmatprep.subr.mxu0 0.0
    %289 = vmatpush1.msra.mxu0 0.0
    %290 = vmatprep.subr.mxu0 0.0
    %291 = vmatpush1.msra.mxu0 0.0
    %292 = vmatprep.subr.mxu0 0.0
    %293 = vmatpush1.msra.mxu0 0.0
    %294 = vmatprep.subr.mxu0 0.0
    %295 = vmatpush1.msra.mxu0 0.0
    %296 = vmatprep.subr.mxu0 0.0
    %297 = vmatpush1.msra.mxu0 0.0
    %298 = vmatprep.subr.mxu0 0.0
    %299 = vmatpush1.msra.mxu0 0.0
    %300 = vmatprep.subr.mxu0 0.0
    %301 = vmatpush1.msra.mxu0 0.0
    %302 = vmatprep.subr.mxu0 0.0
    %303 = vmatpush1.msra.mxu0 0.0
    %304 = vmatprep.subr.mxu0 0.0
    %305 = vmatpush1.msra.mxu0 0.0
    %306 = vmatprep.subr.mxu0 0.0
    %307 = vmatpush1.msra.mxu0 0.0
    %308 = vmatprep.subr.mxu0 0.0
    %309 = vmatpush1.msra.mxu0 0.0
    %310 = vmatprep.mubr.f32.mxu0 0.0
    %311 = vmatmul.mubr.f32.gmra.mrb[0].mxu0 %v244
    %v312 = vpop.f32.mrb[0].mxu0
    %v313 = vadd.f32 0.0, %v312
    %v314 = vpop.f32.mrb[0].mxu0
    %315 = vdwg.mxu0
    %v316 = vadd.f32 %v229, %v313
    %v317 = vld [vmem:[%s4] sm:$0xff]
    %319 = vset.pattern.permute.xlu0 0
    %320 = vperm.xlu0 %319, %v317
    %v321 = vpop.permute.xlu0 %320
    %v323 = vadd.f32 %v316, %v321
    %324 = vst [vmem:[#allocation3] sm:$0xff] %v323
    // Predicated region
    $region30: #{tpu_custom_call.1} parent=1 // pred_check
      _
    $region31: #{tpu_custom_call.1} parent=1 // pred_check_branch
      %326 = sbr.rel (0) target = $region33
    $region32: #{tpu_custom_call.1} parent=1 // pred_region
      %s328 = ssub.s32 128, 128
      %329 = vsyncadd [#allocation4], %s328
      %s331 = sshll.u32 [#allocation3], 4
      %s332 = int_to_ptr.vmem [resolvable:$true] %s331
      %334 = dma.vmem_to_hbm [thread:$0]  %s332, 128, %s7, [#allocation4]
    $region33: #{tpu_custom_call.1} parent=1 // pred_fallthru
      _
    // Predicated region
    $region34: #{tpu_custom_call.1} parent=1 // pred_check
      _
    $region35: #{tpu_custom_call.1} parent=1 // pred_check_branch
      %336 = sbr.rel (0) target = $region37
    $region36: #{tpu_custom_call.1} parent=1 // pred_region
      %337 = dma.done [#allocation4], 128
    $region37: #{tpu_custom_call.1} parent=1 // pred_fallthru
      _
    %338 = vsyncpa [#allocation4], 1

</llo_original>
